<compile_context>
chip_gen: v7x
topology: tpu7x:2x2x1
jax: 0.10.0
libtpu: 0.0.40
codegen_flags: <defaults>
</compile_context>

<pallas_src>
import functools

import jax
import jax.numpy as jnp
from jax.experimental import pallas as pl
from jax.experimental.pallas import tpu as pltpu

_LANE = 128
_NUM_SPLITS = 2          # leading "parallel" grid axis -> 2 TCs on v7x
_SUBLANE = 8


def _round_up(x, m):
    return ((x + m - 1) // m) * m


def _focal_loss_kernel(x0_ref, x1_ref, t_ref, out_ref, *, alpha, n_valid,
                       tile_elems, blocks_per_split, has_pad):
    o = pl.program_id(0)          # split index ("parallel" axis)
    j = pl.program_id(1)          # row-tile index within split ("arbitrary" axis)

    @pl.when(j == 0)
    def _init():
        out_ref[...] = jnp.zeros_like(out_ref)

    def _accumulate(rem):
        # rem: None  -> every element of this tile is valid (fast path, no mask);
        #      else  -> traced int32 scalar = number of valid elements in tile.
        x0 = x0_ref[...].astype(jnp.float32)        # (tile_rows, 128)
        x1 = x1_ref[...].astype(jnp.float32)
        tf = t_ref[...].astype(jnp.float32)         # targets {0,1} as f32 indicator

        d = x1 - x0
        if rem is not None:
            rows, lanes = x0.shape
            row_ids = jax.lax.broadcasted_iota(jnp.int32, (rows, lanes), 0)
            lane_ids = jax.lax.broadcasted_iota(jnp.int32, (rows, lanes), 1)
            validf = (row_ids * lanes + lane_ids < rem).astype(jnp.float32)
            d = d * validf                          # keep padded lanes benign

        # C=2 closed form:  softplus(d) = -log p0,  -log p1 = softplus(d) - d,
        # p1 = sigmoid(d).  One exp + one log1p per sample, no cross-lane work.
        e = jnp.exp(-jnp.abs(d))
        sp = jnp.maximum(d, 0.0) + jnp.log1p(e)     # stable softplus(d)
        nll = sp - d * tf                           # -log p_{target}
        w_t = 1.0 + (jnp.float32(alpha) - 1.0) * tf # CE class weight [1, alpha]
        p1 = jnp.where(d >= 0.0, 1.0, e) / (1.0 + e)   # sigmoid(d), branch-stable
        p0 = 1.0 - p1
        focal = p0 * p0 + p1 * p1                   # (1-p0)^2 + (1-p1)^2 (gamma=2)
        w_nll = w_t * nll

        if rem is not None:
            w_nll = w_nll * validf
            w_t = w_t * validf
            focal = focal * validf

        # Per-step partial sums stay as (8, 128) vregs (pure major-axis VALU adds
        # into the resident output accumulator); no per-step XLU/scalar handoff.
        out_ref[0, 0] += w_nll.reshape(-1, _SUBLANE, _LANE).sum(axis=0)
        out_ref[0, 1] += w_t.reshape(-1, _SUBLANE, _LANE).sum(axis=0)
        out_ref[0, 2] += focal.reshape(-1, _SUBLANE, _LANE).sum(axis=0)

    if has_pad:
        # Only trailing tiles can contain padding; decide per tile at runtime.
        # (tile_start fits int32 for any practical N < ~2^31 elements.)
        tile_start = (o * blocks_per_split + j) * tile_elems
        rem = n_valid - tile_start

        @pl.when(rem >= tile_elems)
        def _full_tile():
            _accumulate(None)

        @pl.when(rem < tile_elems)
        def _ragged_tile():
            _accumulate(rem)
    else:
        _accumulate(None)


def focal_loss(logits, targets, alpha, gamma=2.0, max_tile_rows=8192):
    """logits: (N, 2) float (any dtype), targets: (N,) int in {0,1}. Scalar f32 loss.

    `gamma` is accepted for API parity but, matching the PyTorch module, the
    focal exponent is hard-coded to 2.0.
    """
    N, C = logits.shape
    assert C == 2, "FocalLoss as defined uses a 2-class weight vector [1.0, alpha]"

    max_tile_rows = max(32, (int(max_tile_rows) // 32) * 32)
    rows_min = pl.cdiv(N, _LANE)

    # Few, large grid steps: pick the total step count first (a multiple of the
    # split count), then size the row-tile (multiple of 32 -> valid f32/bf16/int8
    # tiling) so padding stays minimal while each step moves several MiB.
    total_steps = _NUM_SPLITS * pl.cdiv(rows_min, max_tile_rows * _NUM_SPLITS)
    tile_rows = _round_up(pl.cdiv(rows_min, total_steps), 32)
    rows = total_steps * tile_rows
    blocks_per_split = total_steps // _NUM_SPLITS
    n_pad_elems = rows * _LANE
    has_pad = (n_pad_elems != N)

    # Lane-dense class planes; targets as int8; native logit dtype kept (cast to
    # f32 inside the kernel).
    x0 = logits[:, 0]
    x1 = logits[:, 1]
    t = targets.astype(jnp.int8)
    pad = n_pad_elems - N
    if pad:
        x0 = jnp.pad(x0, (0, pad))
        x1 = jnp.pad(x1, (0, pad))
        t = jnp.pad(t, (0, pad))
    x0 = x0.reshape(rows, _LANE)
    x1 = x1.reshape(rows, _LANE)
    t = t.reshape(rows, _LANE)

    kernel = functools.partial(
        _focal_loss_kernel, alpha=float(alpha), n_valid=N,
        tile_elems=tile_rows * _LANE, blocks_per_split=blocks_per_split,
        has_pad=has_pad)

    row_idx = lambda o, j: (o * blocks_per_split + j, 0)

    partials = pl.pallas_call(
        kernel,
        # Per-split partial-sum accumulators: [w*nll, w, focal] as (8,128) vregs.
        out_shape=jax.ShapeDtypeStruct((_NUM_SPLITS, 3, _SUBLANE, _LANE), jnp.float32),
        grid_spec=pltpu.PrefetchScalarGridSpec(
            num_scalar_prefetch=0,
            grid=(_NUM_SPLITS, blocks_per_split),
            in_specs=[
                pl.BlockSpec((tile_rows, _LANE), row_idx),   # x0 plane
                pl.BlockSpec((tile_rows, _LANE), row_idx),   # x1 plane
                pl.BlockSpec((tile_rows, _LANE), row_idx),   # targets (int8)
            ],
            out_specs=pl.BlockSpec(
                (1, 3, _SUBLANE, _LANE), lambda o, j: (o, 0, 0, 0)),
        ),
        compiler_params=pltpu.CompilerParams(
            dimension_semantics=("parallel", "arbitrary"),
            vmem_limit_bytes=32 * 1024 * 1024,   # safe on v5e/v6e/v7x
        ),
    )(x0, x1, t)

    # Tiny epilogue: combine the per-split vreg partials (6 KiB) into the loss.
    sums = jnp.sum(partials, axis=(0, 2, 3))            # (3,)
    ce = sums[0] / sums[1]                               # weighted-mean CE
    focal_mean = sums[2] / jnp.float32(2 * N)            # mean over N*C elements
    return ce * focal_mean


def focal_loss_ref(logits, targets, alpha, gamma=2.0):
    """Pure-JAX reference mirroring the PyTorch forward (for verification)."""
    logits = logits.astype(jnp.float32)
    logp = jax.nn.log_softmax(logits, axis=1)
    p = jnp.exp(logp)
    w = jnp.array([1.0, float(alpha)], dtype=jnp.float32)
    w_t = w[targets]
    logp_t = jnp.take_along_axis(logp, targets.reshape(-1, 1), axis=1)[:, 0]
    ce = -jnp.sum(w_t * logp_t) / jnp.sum(w_t)
    return jnp.mean((1.0 - p) ** 2.0 * ce)


if __name__ == "__main__":
    key = jax.random.PRNGKey(0)
    alpha = 0.75

    # (N, input dtype, max_tile_rows): covers tiny N (whole split masked out),
    # non-multiple-of-128 masking, bf16 inputs, an exact-fit no-mask path, and
    # multi-tile inner loops with and without a ragged last tile.
    cases = [
        (8, jnp.float32, 8192),
        (300, jnp.float32, 8192),
        (2085, jnp.bfloat16, 8192),
        (8192, jnp.float32, 8192),
        (16384, jnp.float32, 32),
        (16000, jnp.float32, 32),
    ]
    for idx, (n, dtype, tile_rows) in enumerate(cases):
        k1, k2 = jax.random.split(jax.random.fold_in(key, idx))
        logits = jax.random.normal(k1, (n, 2), dtype=jnp.float32).astype(dtype)
        targets = jax.random.randint(k2, (n,), 0, 2, dtype=jnp.int32)

        loss = focal_loss(logits, targets, alpha, max_tile_rows=tile_rows)
        jax.block_until_ready(loss)

        ref = focal_loss_ref(logits, targets, alpha)
        assert jnp.allclose(loss, ref, rtol=1e-5, atol=1e-6), (n, str(dtype), loss, ref)

    print("KERNEL_OK")
</pallas_src>

<mosaic_0001>
module attributes {stable_mosaic.version = 11 : i64} {
  func.func @_focal_loss_kernel(%arg0: i32, %arg1: i32, %arg2: memref<32x128xf32, #tpu.memory_space<vmem>>, %arg3: memref<32x128xf32, #tpu.memory_space<vmem>>, %arg4: memref<32x128xi8, #tpu.memory_space<vmem>>, %arg5: memref<1x3x8x128xf32, #tpu.memory_space<vmem>>) attributes {dimension_semantics = [#tpu.dimension_semantics<parallel>, #tpu.dimension_semantics<arbitrary>], iteration_bounds = array<i64: 2, 1>, scalar_prefetch = 0 : i64, scratch_operands = 0 : i64, tpu.core_type = #tpu.core_type<tc>, window_params = [{transform_indices = @transform_0, window_bounds = array<i64: 32, 128>}, {transform_indices = @transform_1, window_bounds = array<i64: 32, 128>}, {transform_indices = @transform_2, window_bounds = array<i64: 32, 128>}, {transform_indices = @transform_3, window_bounds = array<i64: 1, 3, 8, 128>}]} {
    %c0_i32 = arith.constant 0 : i32
    %0 = arith.cmpi eq, %arg1, %c0_i32 : i32
    %1 = arith.extui %0 : i1 to i32
    %c0_i32_0 = arith.constant 0 : i32
    %2 = arith.cmpi ne, %1, %c0_i32_0 : i32
    scf.if %2 {
      %cst = arith.constant 0.000000e+00 : f32
      %13 = vector.broadcast %cst : f32 to vector<1x3x8x128xf32>
      %c0 = arith.constant 0 : index
      %c0_5 = arith.constant 0 : index
      %c0_6 = arith.constant 0 : index
      %c0_7 = arith.constant 0 : index
      %14 = vector.load %arg5[%c0, %c0_5, %c0_6, %c0_7] : memref<1x3x8x128xf32, #tpu.memory_space<vmem>>, vector<1x3x8x128xf32>
      tpu.vector_store %arg5[%c0, %c0_5, %c0_6, %c0_7], %13 {strides = array<i32>} : memref<1x3x8x128xf32, #tpu.memory_space<vmem>>, vector<1x3x8x128xf32>,
    } else {
    }
    %c1_i32 = arith.constant 1 : i32
    %3 = arith.muli %arg0, %c1_i32 : i32
    %4 = arith.addi %3, %arg1 : i32
    %c4096_i32 = arith.constant 4096 : i32
    %5 = arith.muli %4, %c4096_i32 : i32
    %c8_i32 = arith.constant 8 : i32
    %6 = arith.subi %c8_i32, %5 : i32
    %c4096_i32_1 = arith.constant 4096 : i32
    %7 = arith.cmpi sge, %6, %c4096_i32_1 : i32
    %8 = arith.extui %7 : i1 to i32
    %c0_i32_2 = arith.constant 0 : i32
    %9 = arith.cmpi ne, %8, %c0_i32_2 : i32
    scf.if %9 {
      %c0 = arith.constant 0 : index
      %c0_5 = arith.constant 0 : index
      %13 = vector.load %arg2[%c0, %c0_5] : memref<32x128xf32, #tpu.memory_space<vmem>>, vector<32x128xf32>
      %c0_6 = arith.constant 0 : index
      %c0_7 = arith.constant 0 : index
      %14 = vector.load %arg3[%c0_6, %c0_7] : memref<32x128xf32, #tpu.memory_space<vmem>>, vector<32x128xf32>
      %c0_8 = arith.constant 0 : index
      %c0_9 = arith.constant 0 : index
      %15 = vector.load %arg4[%c0_8, %c0_9] : memref<32x128xi8, #tpu.memory_space<vmem>>, vector<32x128xi8>
      %16 = arith.sitofp %15 : vector<32x128xi8> to vector<32x128xf32>
      %17 = arith.subf %14, %13 : vector<32x128xf32>
      %18 = math.absf %17 : vector<32x128xf32>
      %cst = arith.constant 0.000000e+00 : f32
      %19 = vector.broadcast %cst : f32 to vector<32x128xf32>
      %20 = arith.subf %19, %18 : vector<32x128xf32>
      %21 = math.exp %20 : vector<32x128xf32>
      %cst_10 = arith.constant 0.000000e+00 : f32
      %22 = vector.broadcast %cst_10 : f32 to vector<32x128xf32>
      %23 = arith.maximumf %17, %22 : vector<32x128xf32>
      %24 = math.log1p %21 : vector<32x128xf32>
      %25 = arith.addf %23, %24 : vector<32x128xf32>
      %26 = arith.mulf %17, %16 : vector<32x128xf32>
      %27 = arith.subf %25, %26 : vector<32x128xf32>
      %cst_11 = arith.constant 7.500000e-01 : f32
      %cst_12 = arith.constant 1.000000e+00 : f32
      %28 = arith.subf %cst_11, %cst_12 : f32
      %29 = vector.broadcast %28 : f32 to vector<32x128xf32>
      %30 = arith.mulf %29, %16 : vector<32x128xf32>
      %cst_13 = arith.constant 1.000000e+00 : f32
      %31 = vector.broadcast %cst_13 : f32 to vector<32x128xf32>
      %32 = arith.addf %31, %30 : vector<32x128xf32>
      %cst_14 = arith.constant 0.000000e+00 : f32
      %33 = vector.broadcast %cst_14 : f32 to vector<32x128xf32>
      %34 = arith.cmpf oge, %17, %33 : vector<32x128xf32>
      %cst_15 = arith.constant 1.000000e+00 : f32
      %35 = vector.broadcast %cst_15 : f32 to vector<32x128xf32>
      %36 = arith.select %34, %35, %21 : vector<32x128xi1>, vector<32x128xf32>
      %cst_16 = arith.constant 1.000000e+00 : f32
      %37 = vector.broadcast %cst_16 : f32 to vector<32x128xf32>
      %38 = arith.addf %37, %21 : vector<32x128xf32>
      %39 = arith.divf %36, %38 : vector<32x128xf32>
      %cst_17 = arith.constant 1.000000e+00 : f32
      %40 = vector.broadcast %cst_17 : f32 to vector<32x128xf32>
      %41 = arith.subf %40, %39 : vector<32x128xf32>
      %42 = arith.mulf %41, %41 : vector<32x128xf32>
      %43 = arith.mulf %39, %39 : vector<32x128xf32>
      %44 = arith.addf %42, %43 : vector<32x128xf32>
      %45 = arith.mulf %32, %27 : vector<32x128xf32>
      %c0_18 = arith.constant 0 : index
      %c0_19 = arith.constant 0 : index
      %c0_20 = arith.constant 0 : index
      %c0_21 = arith.constant 0 : index
      %46 = vector.load %arg5[%c0_18, %c0_19, %c0_20, %c0_21] : memref<1x3x8x128xf32, #tpu.memory_space<vmem>>, vector<1x1x8x128xf32>
      %47 = vector.shape_cast %46 : vector<1x1x8x128xf32> to vector<8x128xf32>
      %48 = vector.shape_cast %45 : vector<32x128xf32> to vector<4x8x128xf32>
      %cst_22 = arith.constant dense<0.000000e+00> : vector<8x128xf32>
      %49 = vector.multi_reduction <add>, %48, %cst_22 [0] : vector<4x8x128xf32> to vector<8x128xf32>
      %50 = arith.addf %47, %49 : vector<8x128xf32>
      %c0_23 = arith.constant 0 : index
      %c0_24 = arith.constant 0 : index
      %c0_25 = arith.constant 0 : index
      %c0_26 = arith.constant 0 : index
      %51 = vector.load %arg5[%c0_23, %c0_24, %c0_25, %c0_26] : memref<1x3x8x128xf32, #tpu.memory_space<vmem>>, vector<1x1x8x128xf32>
      %52 = vector.shape_cast %51 : vector<1x1x8x128xf32> to vector<8x128xf32>
      %53 = vector.shape_cast %50 : vector<8x128xf32> to vector<1x1x8x128xf32>
      tpu.vector_store %arg5[%c0_23, %c0_24, %c0_25, %c0_26], %53 {strides = array<i32>} : memref<1x3x8x128xf32, #tpu.memory_space<vmem>>, vector<1x1x8x128xf32>,
      %c0_27 = arith.constant 0 : index
      %c1 = arith.constant 1 : index
      %c0_28 = arith.constant 0 : index
      %c0_29 = arith.constant 0 : index
      %54 = vector.load %arg5[%c0_27, %c1, %c0_28, %c0_29] : memref<1x3x8x128xf32, #tpu.memory_space<vmem>>, vector<1x1x8x128xf32>
      %55 = vector.shape_cast %54 : vector<1x1x8x128xf32> to vector<8x128xf32>
      %56 = vector.shape_cast %32 : vector<32x128xf32> to vector<4x8x128xf32>
      %cst_30 = arith.constant dense<0.000000e+00> : vector<8x128xf32>
      %57 = vector.multi_reduction <add>, %56, %cst_30 [0] : vector<4x8x128xf32> to vector<8x128xf32>
      %58 = arith.addf %55, %57 : vector<8x128xf32>
      %c0_31 = arith.constant 0 : index
      %c1_32 = arith.constant 1 : index
      %c0_33 = arith.constant 0 : index
      %c0_34 = arith.constant 0 : index
      %59 = vector.load %arg5[%c0_31, %c1_32, %c0_33, %c0_34] : memref<1x3x8x128xf32, #tpu.memory_space<vmem>>, vector<1x1x8x128xf32>
      %60 = vector.shape_cast %59 : vector<1x1x8x128xf32> to vector<8x128xf32>
      %61 = vector.shape_cast %58 : vector<8x128xf32> to vector<1x1x8x128xf32>
      tpu.vector_store %arg5[%c0_31, %c1_32, %c0_33, %c0_34], %61 {strides = array<i32>} : memref<1x3x8x128xf32, #tpu.memory_space<vmem>>, vector<1x1x8x128xf32>,
      %c0_35 = arith.constant 0 : index
      %c2 = arith.constant 2 : index
      %c0_36 = arith.constant 0 : index
      %c0_37 = arith.constant 0 : index
      %62 = vector.load %arg5[%c0_35, %c2, %c0_36, %c0_37] : memref<1x3x8x128xf32, #tpu.memory_space<vmem>>, vector<1x1x8x128xf32>
      %63 = vector.shape_cast %62 : vector<1x1x8x128xf32> to vector<8x128xf32>
      %64 = vector.shape_cast %44 : vector<32x128xf32> to vector<4x8x128xf32>
      %cst_38 = arith.constant dense<0.000000e+00> : vector<8x128xf32>
      %65 = vector.multi_reduction <add>, %64, %cst_38 [0] : vector<4x8x128xf32> to vector<8x128xf32>
      %66 = arith.addf %63, %65 : vector<8x128xf32>
      %c0_39 = arith.constant 0 : index
      %c2_40 = arith.constant 2 : index
      %c0_41 = arith.constant 0 : index
      %c0_42 = arith.constant 0 : index
      %67 = vector.load %arg5[%c0_39, %c2_40, %c0_41, %c0_42] : memref<1x3x8x128xf32, #tpu.memory_space<vmem>>, vector<1x1x8x128xf32>
      %68 = vector.shape_cast %67 : vector<1x1x8x128xf32> to vector<8x128xf32>
      %69 = vector.shape_cast %66 : vector<8x128xf32> to vector<1x1x8x128xf32>
      tpu.vector_store %arg5[%c0_39, %c2_40, %c0_41, %c0_42], %69 {strides = array<i32>} : memref<1x3x8x128xf32, #tpu.memory_space<vmem>>, vector<1x1x8x128xf32>,
    } else {
    }
    %c4096_i32_3 = arith.constant 4096 : i32
    %10 = arith.cmpi slt, %6, %c4096_i32_3 : i32
    %11 = arith.extui %10 : i1 to i32
    %c0_i32_4 = arith.constant 0 : i32
    %12 = arith.cmpi ne, %11, %c0_i32_4 : i32
    scf.if %12 {
      %c0 = arith.constant 0 : index
      %c0_5 = arith.constant 0 : index
      %13 = vector.load %arg2[%c0, %c0_5] : memref<32x128xf32, #tpu.memory_space<vmem>>, vector<32x128xf32>
      %c0_6 = arith.constant 0 : index
      %c0_7 = arith.constant 0 : index
      %14 = vector.load %arg3[%c0_6, %c0_7] : memref<32x128xf32, #tpu.memory_space<vmem>>, vector<32x128xf32>
      %c0_8 = arith.constant 0 : index
      %c0_9 = arith.constant 0 : index
      %15 = vector.load %arg4[%c0_8, %c0_9] : memref<32x128xi8, #tpu.memory_space<vmem>>, vector<32x128xi8>
      %16 = arith.sitofp %15 : vector<32x128xi8> to vector<32x128xf32>
      %17 = arith.subf %14, %13 : vector<32x128xf32>
      %18 = tpu.iota {dimensions = array<i32: 0>} : vector<32x128xi32>
      %19 = tpu.iota {dimensions = array<i32: 1>} : vector<32x128xi32>
      %c128_i32 = arith.constant 128 : i32
      %20 = vector.broadcast %c128_i32 : i32 to vector<32x128xi32>
      %21 = arith.muli %18, %20 : vector<32x128xi32>
      %22 = arith.addi %21, %19 : vector<32x128xi32>
      %23 = vector.broadcast %6 : i32 to vector<32x128xi32>
      %24 = arith.cmpi slt, %22, %23 : vector<32x128xi32>
      %25 = arith.extui %24 : vector<32x128xi1> to vector<32x128xi32>
      %26 = arith.sitofp %25 : vector<32x128xi32> to vector<32x128xf32>
      %27 = arith.mulf %17, %26 : vector<32x128xf32>
      %28 = math.absf %27 : vector<32x128xf32>
      %cst = arith.constant 0.000000e+00 : f32
      %29 = vector.broadcast %cst : f32 to vector<32x128xf32>
      %30 = arith.subf %29, %28 : vector<32x128xf32>
      %31 = math.exp %30 : vector<32x128xf32>
      %cst_10 = arith.constant 0.000000e+00 : f32
      %32 = vector.broadcast %cst_10 : f32 to vector<32x128xf32>
      %33 = arith.maximumf %27, %32 : vector<32x128xf32>
      %34 = math.log1p %31 : vector<32x128xf32>
      %35 = arith.addf %33, %34 : vector<32x128xf32>
      %36 = arith.mulf %27, %16 : vector<32x128xf32>
      %37 = arith.subf %35, %36 : vector<32x128xf32>
      %cst_11 = arith.constant 7.500000e-01 : f32
      %cst_12 = arith.constant 1.000000e+00 : f32
      %38 = arith.subf %cst_11, %cst_12 : f32
      %39 = vector.broadcast %38 : f32 to vector<32x128xf32>
      %40 = arith.mulf %39, %16 : vector<32x128xf32>
      %cst_13 = arith.constant 1.000000e+00 : f32
      %41 = vector.broadcast %cst_13 : f32 to vector<32x128xf32>
      %42 = arith.addf %41, %40 : vector<32x128xf32>
      %cst_14 = arith.constant 0.000000e+00 : f32
      %43 = vector.broadcast %cst_14 : f32 to vector<32x128xf32>
      %44 = arith.cmpf oge, %27, %43 : vector<32x128xf32>
      %cst_15 = arith.constant 1.000000e+00 : f32
      %45 = vector.broadcast %cst_15 : f32 to vector<32x128xf32>
      %46 = arith.select %44, %45, %31 : vector<32x128xi1>, vector<32x128xf32>
      %cst_16 = arith.constant 1.000000e+00 : f32
      %47 = vector.broadcast %cst_16 : f32 to vector<32x128xf32>
      %48 = arith.addf %47, %31 : vector<32x128xf32>
      %49 = arith.divf %46, %48 : vector<32x128xf32>
      %cst_17 = arith.constant 1.000000e+00 : f32
      %50 = vector.broadcast %cst_17 : f32 to vector<32x128xf32>
      %51 = arith.subf %50, %49 : vector<32x128xf32>
      %52 = arith.mulf %51, %51 : vector<32x128xf32>
      %53 = arith.mulf %49, %49 : vector<32x128xf32>
      %54 = arith.addf %52, %53 : vector<32x128xf32>
      %55 = arith.mulf %42, %37 : vector<32x128xf32>
      %56 = arith.mulf %55, %26 : vector<32x128xf32>
      %57 = arith.mulf %42, %26 : vector<32x128xf32>
      %58 = arith.mulf %54, %26 : vector<32x128xf32>
      %c0_18 = arith.constant 0 : index
      %c0_19 = arith.constant 0 : index
      %c0_20 = arith.constant 0 : index
      %c0_21 = arith.constant 0 : index
      %59 = vector.load %arg5[%c0_18, %c0_19, %c0_20, %c0_21] : memref<1x3x8x128xf32, #tpu.memory_space<vmem>>, vector<1x1x8x128xf32>
      %60 = vector.shape_cast %59 : vector<1x1x8x128xf32> to vector<8x128xf32>
      %61 = vector.shape_cast %56 : vector<32x128xf32> to vector<4x8x128xf32>
      %cst_22 = arith.constant dense<0.000000e+00> : vector<8x128xf32>
      %62 = vector.multi_reduction <add>, %61, %cst_22 [0] : vector<4x8x128xf32> to vector<8x128xf32>
      %63 = arith.addf %60, %62 : vector<8x128xf32>
      %c0_23 = arith.constant 0 : index
      %c0_24 = arith.constant 0 : index
      %c0_25 = arith.constant 0 : index
      %c0_26 = arith.constant 0 : index
      %64 = vector.load %arg5[%c0_23, %c0_24, %c0_25, %c0_26] : memref<1x3x8x128xf32, #tpu.memory_space<vmem>>, vector<1x1x8x128xf32>
      %65 = vector.shape_cast %64 : vector<1x1x8x128xf32> to vector<8x128xf32>
      %66 = vector.shape_cast %63 : vector<8x128xf32> to vector<1x1x8x128xf32>
      tpu.vector_store %arg5[%c0_23, %c0_24, %c0_25, %c0_26], %66 {strides = array<i32>} : memref<1x3x8x128xf32, #tpu.memory_space<vmem>>, vector<1x1x8x128xf32>,
      %c0_27 = arith.constant 0 : index
      %c1 = arith.constant 1 : index
      %c0_28 = arith.constant 0 : index
      %c0_29 = arith.constant 0 : index
      %67 = vector.load %arg5[%c0_27, %c1, %c0_28, %c0_29] : memref<1x3x8x128xf32, #tpu.memory_space<vmem>>, vector<1x1x8x128xf32>
      %68 = vector.shape_cast %67 : vector<1x1x8x128xf32> to vector<8x128xf32>
      %69 = vector.shape_cast %57 : vector<32x128xf32> to vector<4x8x128xf32>
      %cst_30 = arith.constant dense<0.000000e+00> : vector<8x128xf32>
      %70 = vector.multi_reduction <add>, %69, %cst_30 [0] : vector<4x8x128xf32> to vector<8x128xf32>
      %71 = arith.addf %68, %70 : vector<8x128xf32>
      %c0_31 = arith.constant 0 : index
      %c1_32 = arith.constant 1 : index
      %c0_33 = arith.constant 0 : index
      %c0_34 = arith.constant 0 : index
      %72 = vector.load %arg5[%c0_31, %c1_32, %c0_33, %c0_34] : memref<1x3x8x128xf32, #tpu.memory_space<vmem>>, vector<1x1x8x128xf32>
      %73 = vector.shape_cast %72 : vector<1x1x8x128xf32> to vector<8x128xf32>
      %74 = vector.shape_cast %71 : vector<8x128xf32> to vector<1x1x8x128xf32>
      tpu.vector_store %arg5[%c0_31, %c1_32, %c0_33, %c0_34], %74 {strides = array<i32>} : memref<1x3x8x128xf32, #tpu.memory_space<vmem>>, vector<1x1x8x128xf32>,
      %c0_35 = arith.constant 0 : index
      %c2 = arith.constant 2 : index
      %c0_36 = arith.constant 0 : index
      %c0_37 = arith.constant 0 : index
      %75 = vector.load %arg5[%c0_35, %c2, %c0_36, %c0_37] : memref<1x3x8x128xf32, #tpu.memory_space<vmem>>, vector<1x1x8x128xf32>
      %76 = vector.shape_cast %75 : vector<1x1x8x128xf32> to vector<8x128xf32>
      %77 = vector.shape_cast %58 : vector<32x128xf32> to vector<4x8x128xf32>
      %cst_38 = arith.constant dense<0.000000e+00> : vector<8x128xf32>
      %78 = vector.multi_reduction <add>, %77, %cst_38 [0] : vector<4x8x128xf32> to vector<8x128xf32>
      %79 = arith.addf %76, %78 : vector<8x128xf32>
      %c0_39 = arith.constant 0 : index
      %c2_40 = arith.constant 2 : index
      %c0_41 = arith.constant 0 : index
      %c0_42 = arith.constant 0 : index
      %80 = vector.load %arg5[%c0_39, %c2_40, %c0_41, %c0_42] : memref<1x3x8x128xf32, #tpu.memory_space<vmem>>, vector<1x1x8x128xf32>
      %81 = vector.shape_cast %80 : vector<1x1x8x128xf32> to vector<8x128xf32>
      %82 = vector.shape_cast %79 : vector<8x128xf32> to vector<1x1x8x128xf32>
      tpu.vector_store %arg5[%c0_39, %c2_40, %c0_41, %c0_42], %82 {strides = array<i32>} : memref<1x3x8x128xf32, #tpu.memory_space<vmem>>, vector<1x1x8x128xf32>,
    } else {
    }
    return
  }
  func.func @transform_0(%arg0: i32, %arg1: i32) -> (i32, i32) {
    %c1_i32 = arith.constant 1 : i32
    %0 = arith.muli %arg0, %c1_i32 : i32
    %1 = arith.addi %0, %arg1 : i32
    %c0_i32 = arith.constant 0 : i32
    %c0_i32_0 = arith.constant 0 : i32
    return %1, %c0_i32 : i32, i32
  }
  func.func @transform_1(%arg0: i32, %arg1: i32) -> (i32, i32) {
    %c1_i32 = arith.constant 1 : i32
    %0 = arith.muli %arg0, %c1_i32 : i32
    %1 = arith.addi %0, %arg1 : i32
    %c0_i32 = arith.constant 0 : i32
    %c0_i32_0 = arith.constant 0 : i32
    return %1, %c0_i32 : i32, i32
  }
  func.func @transform_2(%arg0: i32, %arg1: i32) -> (i32, i32) {
    %c1_i32 = arith.constant 1 : i32
    %0 = arith.muli %arg0, %c1_i32 : i32
    %1 = arith.addi %0, %arg1 : i32
    %c0_i32 = arith.constant 0 : i32
    %c0_i32_0 = arith.constant 0 : i32
    return %1, %c0_i32 : i32, i32
  }
  func.func @transform_3(%arg0: i32, %arg1: i32) -> (i32, i32, i32, i32) {
    %c0_i32 = arith.constant 0 : i32
    %c0_i32_0 = arith.constant 0 : i32
    %c0_i32_1 = arith.constant 0 : i32
    %c0_i32_2 = arith.constant 0 : i32
    return %arg0, %c0_i32, %c0_i32_0, %c0_i32_1 : i32, i32, i32, i32
  }
}

</mosaic_0001>

<llo_original>
// kernel: tpu_custom_call.1
$region0: #{tpu_custom_call.1}
  #allocation0 [shape = 'u32[]', space=smem, size = 0x4, offset = 0x4, fixed_abs, tag = 'smem constant byte address 0x4 - core index']
  #allocation1 [shape = 'u32[144,128]{1,0:T(1,128)}', space=vmem, size = 0x12000, scoped, tag = 'internal scratch']
  %s0 = inlined_call_operand.hbm [shape: f32[64,128], index: 0, kind: input, shape index: {}]
  %s1 = inlined_call_operand.hbm [shape: f32[64,128], index: 1, kind: input, shape index: {}]
  %s2 = inlined_call_operand.hbm [shape: s8[64,128], index: 2, kind: input, shape index: {}]
  %s3 = inlined_call_operand.hbm [shape: f32[2,3,8,128], index: 3, kind: output, shape index: {}]
  %s4 = sld [smem:[#allocation0]]
  $region69: #{tpu_custom_call.1} parent=0
    _
  %s6 = ssub.s32 1, %s4
  %s7 = scalar_select 0, %s6, %s4
  $region1: #{tpu_custom_call.1} parent=0
    #allocation2 [shape = 'u8[32768]{0}', space=vmem, size = 0x8000, scoped, tag = 'input window, operand 0']
    #allocation3 [shape = 's32[2]{0}', space=sflag, size = 0x8, scoped, tag = 'scoped memory for tpu_custom_call.1']
    #allocation4 [shape = 's32[2]{0}', space=sflag, size = 0x8, scoped, tag = 'scoped memory for tpu_custom_call.1']
    #allocation5 [shape = 'u8[32768]{0}', space=vmem, size = 0x8000, scoped, tag = 'input window, operand 1']
    #allocation6 [shape = 's32[2]{0}', space=sflag, size = 0x8, scoped, tag = 'scoped memory for tpu_custom_call.1']
    #allocation7 [shape = 'u8[8192]{0}', space=vmem, size = 0x2000, scoped, tag = 'input window, operand 2']
    #allocation8 [shape = 'u8[24576]{0}', space=vmem, size = 0x6000, scoped, tag = 'output window, operand 0']
    %8 = vsyncpa [#allocation3], 0
    %s9 = scalar_lea.sflag [#allocation3], 1
    %10 = vsyncpa %s9, 0
    %11 = vsyncpa [#allocation6], 0
    %s12 = scalar_lea.sflag [#allocation6], 1
    %13 = vsyncpa %s12, 0
    %14 = vsyncpa [#allocation4], 0
    %s15 = scalar_lea.sflag [#allocation4], 1
    %16 = vsyncpa %s15, 0
    loop: start=0, step=1, limit=4
    $region2: #{tpu_custom_call.1} parent=1 // loop_pre_header
      _
    $region3: #{tpu_custom_call.1} parent=1 // loop_header
      %s18 = sphi 0, %s22
      %p19 = scmp.ge.s32.totalorder %s18, 4
      %s25 = sphi 0, %s37
      %s26 = sphi 0, %s33
      %s27 = sphi 0, %s25
      %s28 = sphi 0, %s26
      %s29 = sphi 0, %s27
      %s30 = sphi 0, %s28
      %s42 = sphi 0, %s44
      %s45 = sphi 0, %s42
      %s46 = sphi 0, %s45
      %s62 = sphi 0, %s46
      %s70 = sphi 0, %s72
      %s73 = sphi 0, %s70
      %s74 = sphi 0, %s73
      %s90 = sphi 0, %s74
      %s98 = sphi 0, %s100
      %s101 = sphi 0, %s98
      %s102 = sphi 0, %s101
      %s118 = sphi 0, %s102
      %s124 = sphi 0, %s126
      %s127 = sphi 0, %s124
      %s128 = sphi 0, %s127
      %s144 = sphi 0, %s128
    $region4: #{tpu_custom_call.1} parent=1 // loop_header_branch
      %21 = sbr.rel (%p19) target = $region8
    $region5: #{tpu_custom_call.1} parent=1 // loop_body
      %s23 = ssub.s32 %s18, 1
      %s24 = ssub.s32 %s18, 2
      %s31 = sadd.s32 1, %s26
      %p32 = scmp.ge.s32.totalorder %s31, 1
      %s33 = scalar_select %p32, 0, %s31
      %s34 = sadd.s32 1, %s25
      %s35 = scalar_select %p32, %s34, %s25
      %p36 = scmp.ge.s32.totalorder %s35, 2
      %s37 = scalar_select %p36, 0, %s35
      %s38 = sadd.s32 %s25, %s26
      %s39 = sadd.s32 %s37, %s33
      %s40 = ssub.s32 %s38, %s39
      %p41 = scmp.eq.s32.totalorder %s40, 0
      %s43 = sadd.s32 %s42, 1
      %s44 = scalar_select %p41, %s42, %s43
      %p47 = pneg %p41
      %p48 = scmp.eq.s32.totalorder %s18, 1
      %p49 = por %p47, %p48
      %p50 = scmp.ne.s32.totalorder %s42, %s45
      %p51 = scmp.eq.s32.totalorder %s18, 0
      %p52 = por %p50, %p51
      %p53 = scmp.ne.s32.totalorder %s42, %s45
      %p54 = scmp.eq.s32.totalorder %s23, 1
      %p55 = por %p53, %p54
      %p56 = scmp.ne.s32.totalorder %s45, %s46
      %p57 = scmp.eq.s32.totalorder %s23, 0
      %p58 = por %p56, %p57
      %p59 = scmp.ne.s32.totalorder %s45, %s46
      %p60 = scmp.eq.s32.totalorder %s24, 1
      %p61 = por %p59, %p60
      %p63 = scmp.ne.s32.totalorder %s46, %s62
      %p64 = scmp.eq.s32.totalorder %s24, 0
      %p65 = por %p63, %p64
      %s66 = sadd.s32 %s25, %s26
      %s67 = sadd.s32 %s37, %s33
      %s68 = ssub.s32 %s66, %s67
      %p69 = scmp.eq.s32.totalorder %s68, 0
      %s71 = sadd.s32 %s70, 1
      %s72 = scalar_select %p69, %s70, %s71
      %p75 = pneg %p69
      %p76 = scmp.eq.s32.totalorder %s18, 1
      %p77 = por %p75, %p76
      %p78 = scmp.ne.s32.totalorder %s70, %s73
      %p79 = scmp.eq.s32.totalorder %s18, 0
      %p80 = por %p78, %p79
      %p81 = scmp.ne.s32.totalorder %s70, %s73
      %p82 = scmp.eq.s32.totalorder %s23, 1
      %p83 = por %p81, %p82
      %p84 = scmp.ne.s32.totalorder %s73, %s74
      %p85 = scmp.eq.s32.totalorder %s23, 0
      %p86 = por %p84, %p85
      %p87 = scmp.ne.s32.totalorder %s73, %s74
      %p88 = scmp.eq.s32.totalorder %s24, 1
      %p89 = por %p87, %p88
      %p91 = scmp.ne.s32.totalorder %s74, %s90
      %p92 = scmp.eq.s32.totalorder %s24, 0
      %p93 = por %p91, %p92
      %s94 = sadd.s32 %s25, %s26
      %s95 = sadd.s32 %s37, %s33
      %s96 = ssub.s32 %s94, %s95
      %p97 = scmp.eq.s32.totalorder %s96, 0
      %s99 = sadd.s32 %s98, 1
      %s100 = scalar_select %p97, %s98, %s99
      %p103 = pneg %p97
      %p104 = scmp.eq.s32.totalorder %s18, 1
      %p105 = por %p103, %p104
      %p106 = scmp.ne.s32.totalorder %s98, %s101
      %p107 = scmp.eq.s32.totalorder %s18, 0
      %p108 = por %p106, %p107
      %p109 = scmp.ne.s32.totalorder %s98, %s101
      %p110 = scmp.eq.s32.totalorder %s23, 1
      %p111 = por %p109, %p110
      %p112 = scmp.ne.s32.totalorder %s101, %s102
      %p113 = scmp.eq.s32.totalorder %s23, 0
      %p114 = por %p112, %p113
      %p115 = scmp.ne.s32.totalorder %s101, %s102
      %p116 = scmp.eq.s32.totalorder %s24, 1
      %p117 = por %p115, %p116
      %p119 = scmp.ne.s32.totalorder %s102, %s118
      %p120 = scmp.eq.s32.totalorder %s24, 0
      %p121 = por %p119, %p120
      %s122 = ssub.s32 %s25, %s37
      %p123 = scmp.eq.s32.totalorder %s122, 0
      %s125 = sadd.s32 %s124, 1
      %s126 = scalar_select %p123, %s124, %s125
      %p129 = pneg %p123
      %p130 = scmp.eq.s32.totalorder %s18, 1
      %p131 = por %p129, %p130
      %p132 = scmp.ne.s32.totalorder %s124, %s127
      %p133 = scmp.eq.s32.totalorder %s18, 0
      %p134 = por %p132, %p133
      %p135 = scmp.ne.s32.totalorder %s124, %s127
      %p136 = scmp.eq.s32.totalorder %s23, 1
      %p137 = por %p135, %p136
      %p138 = scmp.ne.s32.totalorder %s127, %s128
      %p139 = scmp.eq.s32.totalorder %s23, 0
      %p140 = por %p138, %p139
      %p141 = scmp.ne.s32.totalorder %s127, %s128
      %p142 = scmp.eq.s32.totalorder %s24, 1
      %p143 = por %p141, %p142
      %p145 = scmp.ne.s32.totalorder %s128, %s144
      %p146 = scmp.eq.s32.totalorder %s24, 0
      %p147 = por %p145, %p146
      %p148 = scmp.le.s32.totalorder 1, %s18
      %p149 = scmp.lt.s32.totalorder %s18, 3
      %p150 = pnand %p148, %p149
      %p151 = pneg %p150
      // Predicated region
      $region9: #{tpu_custom_call.1} parent=5 // pred_check
        _
      $region10: #{tpu_custom_call.1} parent=5 // pred_check_branch
        %153 = sbr.rel (%p150) target = $region12
      $region11: #{tpu_custom_call.1} parent=5 // pred_region
        %s154 = ssub.s32 %s18, 1
      $region12: #{tpu_custom_call.1} parent=5 // pred_fallthru
        _
      %p155 = scmp.lt.s32.totalorder %s18, 2
      // Predicated region
      $region13: #{tpu_custom_call.1} parent=5 // pred_check
        %p156 = pneg %p155
      $region14: #{tpu_custom_call.1} parent=5 // pred_check_branch
        %158 = sbr.rel (%p156) target = $region16
      $region15: #{tpu_custom_call.1} parent=5 // pred_region
        // Predicated region
        $region17: #{tpu_custom_call.1} parent=15 // pred_check
          %p159 = pneg %p52
        $region18: #{tpu_custom_call.1} parent=15 // pred_check_branch
          %161 = sbr.rel (%p159) target = $region20
        $region19: #{tpu_custom_call.1} parent=15 // pred_region
          %s162 = sand.u32 %s42, 1
          %s163 = scalar_lea.sflag [#allocation3], %s162
          %s164 = sand.u32 %s42, 1
          %s165 = smul.addr %s164, 32
          %s166 = scalar_lea.vmem [#allocation2], %s165
          %s167 = sadd.s32 %s25, %s26
          %s168 = smul.u32 4, %s167
          %s170 = ssub.s32 512, 512
          %171 = vsyncadd %s163, %s170
          %s172 = smul.addr %s168, 128
          %s173 = scalar_lea.hbm %s0, %s172
          %s174 = sshll.u32 %s166, 4
          %s175 = int_to_ptr.vmem [resolvable:$true] %s174
          %180 = dma.hbm_to_vmem [thread:$0]  %s173, 512, %s175, %s163, 128, 128, 8
        $region20: #{tpu_custom_call.1} parent=15 // pred_fallthru
          _
        // Predicated region
        $region21: #{tpu_custom_call.1} parent=15 // pred_check
          %p181 = pneg %p80
        $region22: #{tpu_custom_call.1} parent=15 // pred_check_branch
          %183 = sbr.rel (%p181) target = $region24
        $region23: #{tpu_custom_call.1} parent=15 // pred_region
          %s184 = sand.u32 %s18, 1
          %s185 = scalar_lea.sflag [#allocation6], %s184
          %s186 = sand.u32 %s70, 1
          %s187 = smul.addr %s186, 32
          %s188 = scalar_lea.vmem [#allocation5], %s187
          %s189 = sadd.s32 %s25, %s26
          %s190 = smul.u32 4, %s189
          %s192 = ssub.s32 512, 512
          %193 = vsyncadd %s185, %s192
          %s194 = smul.addr %s190, 128
          %s195 = scalar_lea.hbm %s1, %s194
          %s196 = sshll.u32 %s188, 4
          %s197 = int_to_ptr.vmem [resolvable:$true] %s196
          %202 = dma.hbm_to_vmem [thread:$0]  %s195, 512, %s197, %s185, 128, 128, 8
        $region24: #{tpu_custom_call.1} parent=15 // pred_fallthru
          _
        // Predicated region
        $region25: #{tpu_custom_call.1} parent=15 // pred_check
          %p203 = pneg %p108
        $region26: #{tpu_custom_call.1} parent=15 // pred_check_branch
          %205 = sbr.rel (%p203) target = $region28
        $region27: #{tpu_custom_call.1} parent=15 // pred_region
          %s206 = sand.u32 %s18, 1
          %s207 = scalar_lea.sflag [#allocation6], %s206
          %s208 = sand.u32 %s98, 1
          %s209 = smul.addr %s208, 8
          %s210 = scalar_lea.vmem [#allocation7], %s209
          %s211 = sadd.s32 %s25, %s26
          %s213 = ssub.s32 128, 128
          %214 = vsyncadd %s207, %s213
          %s215 = smul.addr %s211, 128
          %s216 = scalar_lea.hbm %s2, %s215
          %s218 = sshll.u32 %s210, 4
          %s219 = int_to_ptr.vmem [resolvable:$true] %s218
          %221 = dma.hbm_to_vmem [thread:$0]  %s216, 128, %s219, %s207
        $region28: #{tpu_custom_call.1} parent=15 // pred_fallthru
          _
      $region16: #{tpu_custom_call.1} parent=5 // pred_fallthru
        _
      %p222 = scmp.le.s32.totalorder 1, %s18
      %p223 = scmp.lt.s32.totalorder %s18, 3
      %p224 = pnand %p222, %p223
      %p225 = pneg %p224
      // Predicated region
      $region29: #{tpu_custom_call.1} parent=5 // pred_check
        _
      $region30: #{tpu_custom_call.1} parent=5 // pred_check_branch
        %227 = sbr.rel (%p224) target = $region32
      $region31: #{tpu_custom_call.1} parent=5 // pred_region
        %s228 = ssub.s32 %s18, 1
        %s229 = sand.u32 %s45, 1
        %s230 = scalar_lea.sflag [#allocation3], %s229
        %s231 = sand.u32 %s45, 1
        %s232 = smul.addr %s231, 32
        %s233 = scalar_lea.vmem [#allocation2], %s232
        // Predicated region
        $region33: #{tpu_custom_call.1} parent=31 // pred_check
          %p234 = pneg %p58
        $region34: #{tpu_custom_call.1} parent=31 // pred_check_branch
          %236 = sbr.rel (%p234) target = $region36
        $region35: #{tpu_custom_call.1} parent=31 // pred_region
          %237 = dma.done %s230, 512
        $region36: #{tpu_custom_call.1} parent=31 // pred_fallthru
          _
        %s238 = sand.u32 %s23, 1
        %s239 = scalar_lea.sflag [#allocation6], %s238
        %s240 = sand.u32 %s73, 1
        %s241 = smul.addr %s240, 32
        %s242 = scalar_lea.vmem [#allocation5], %s241
        // Predicated region
        $region37: #{tpu_custom_call.1} parent=31 // pred_check
          %p243 = pneg %p86
        $region38: #{tpu_custom_call.1} parent=31 // pred_check_branch
          %245 = sbr.rel (%p243) target = $region40
        $region39: #{tpu_custom_call.1} parent=31 // pred_region
          %246 = dma.done %s239, 512
        $region40: #{tpu_custom_call.1} parent=31 // pred_fallthru
          _
        %s247 = sand.u32 %s23, 1
        %s248 = scalar_lea.sflag [#allocation6], %s247
        %s249 = sand.u32 %s101, 1
        %s250 = smul.addr %s249, 8
        %s251 = scalar_lea.vmem [#allocation7], %s250
        // Predicated region
        $region41: #{tpu_custom_call.1} parent=31 // pred_check
          %p252 = pneg %p114
        $region42: #{tpu_custom_call.1} parent=31 // pred_check_branch
          %254 = sbr.rel (%p252) target = $region44
        $region43: #{tpu_custom_call.1} parent=31 // pred_region
          %255 = dma.done %s248, 128
        $region44: #{tpu_custom_call.1} parent=31 // pred_fallthru
          _
        %s256 = sand.u32 %s45, 1
        %s257 = scalar_lea.sflag [#allocation3], %s256
        %s258 = sand.u32 %s45, 1
        %s259 = smul.addr %s258, 32
        %s260 = scalar_lea.vmem [#allocation2], %s259
        %p261 = pneg %p58
        %p262 = pneg %p55
        %s263 = sand.u32 %s23, 1
        %s264 = scalar_lea.sflag [#allocation6], %s263
        %s265 = sand.u32 %s73, 1
        %s266 = smul.addr %s265, 32
        %s267 = scalar_lea.vmem [#allocation5], %s266
        %p268 = pneg %p86
        %p269 = pneg %p83
        %s270 = sand.u32 %s23, 1
        %s271 = scalar_lea.sflag [#allocation6], %s270
        %s272 = sand.u32 %s101, 1
        %s273 = smul.addr %s272, 8
        %s274 = scalar_lea.vmem [#allocation7], %s273
        %p275 = pneg %p114
        %p276 = pneg %p111
        %p277 = pneg %p140
        %p278 = pneg %p137
        %s279 = sand.u32 %s127, 1
        %s280 = scalar_lea.sflag [#allocation4], %s279
        %s281 = sand.u32 %s127, 1
        %s282 = smul.addr %s281, 24
        %s283 = scalar_lea.vmem [#allocation8], %s282
        %s284 = sadd.s32 %s27, %s28
        %s285 = smul.u32 4, %s284
        %s286 = sadd.s32 %s27, %s28
        %s287 = smul.u32 4, %s286
        %s288 = sadd.s32 %s27, %s28
        %p289 = scmp.eq.s32.totalorder %s28, 0
        // Predicated region
        $region45: #{tpu_custom_call.1} parent=31 // pred_check
          %p290 = pneg %p289
        $region46: #{tpu_custom_call.1} parent=31 // pred_check_branch
          %292 = sbr.rel (%p290) target = $region48
        $region47: #{tpu_custom_call.1} parent=31 // pred_region
          %293 = vst [vmem:[%s283] sm:$0xff] 0.0
          %294 = vst [vmem:[%s283 + $0x8] sm:$0xff] 0.0
          %295 = vst [vmem:[%s283 + $0x10] sm:$0xff] 0.0
        $region48: #{tpu_custom_call.1} parent=31 // pred_fallthru
          _
        %s296 = sadd.s32 %s27, %s28
        %s297 = smul.u32 %s296, 4096
        %s298 = ssub.s32 8, %s297
        %p299 = scmp.ge.s32.totalorder %s298, 4096
        // Predicated region
        $region49: #{tpu_custom_call.1} parent=31 // pred_check
          %p300 = pneg %p299
        $region50: #{tpu_custom_call.1} parent=31 // pred_check_branch
          %302 = sbr.rel (%p300) target = $region52
        $region51: #{tpu_custom_call.1} parent=31 // pred_region
          %v303 = vld [vmem:[%s233] sm:$0xff]
          %v304 = vld [vmem:[%s233 + $0x8] sm:$0xff]
          %v305 = vld [vmem:[%s233 + $0x10] sm:$0xff]
          %v306 = vld [vmem:[%s233 + $0x18] sm:$0xff]
          %v307 = vld [vmem:[%s242] sm:$0xff]
          %v308 = vld [vmem:[%s242 + $0x8] sm:$0xff]
          %v309 = vld [vmem:[%s242 + $0x10] sm:$0xff]
          %v310 = vld [vmem:[%s242 + $0x18] sm:$0xff]
          %v311 = vld [vmem:[%s251] sm:$0xff]
          %v312 = vunpack.c.0.s8 %v311
          %v313 = vunpack.c.1.s8 %v311
          %v314 = vunpack.c.2.s8 %v311
          %v315 = vunpack.c.3.s8 %v311
          %v316 = vcvt.s32.f32 %v312
          %v317 = vcvt.s32.f32 %v313
          %v318 = vcvt.s32.f32 %v314
          %v319 = vcvt.s32.f32 %v315
          %v320 = vsub.f32 %v307, %v303
          %v321 = vsub.f32 %v308, %v304
          %v322 = vsub.f32 %v309, %v305
          %v323 = vsub.f32 %v310, %v306
          %v324 = vand.u32 2147483647, %v320
          %v325 = vand.u32 2147483647, %v321
          %v326 = vand.u32 2147483647, %v322
          %v327 = vand.u32 2147483647, %v323
          %v328 = vsub.f32 0.0, %v324
          %v329 = vsub.f32 0.0, %v325
          %v330 = vsub.f32 0.0, %v326
          %v331 = vsub.f32 0.0, %v327
          %v332 = vmul.f32 %v328, 1.442695
          %v333 = vpow.pop %v332
          %v334 = vmul.f32 %v329, 1.442695
          %v335 = vpow.pop %v334
          %v336 = vmul.f32 %v330, 1.442695
          %v337 = vpow.pop %v336
          %v338 = vmul.f32 %v331, 1.442695
          %v339 = vpow.pop %v338
          %v340 = vmax.f32 %v320, 0.0
          %v341 = vmax.f32 %v321, 0.0
          %v342 = vmax.f32 %v322, 0.0
          %v343 = vmax.f32 %v323, 0.0
          %v344 = vadd.f32 %v333, 1.0
          %v345 = vlog2.pop %v344
          %v346 = vmul.f32 %v345, 0.6931472
          %v347 = vmul.f32 -0.5, %v333
          %v348 = vadd.f32 %v347, 1.0
          %v349 = vmul.f32 %v348, %v333
          %v350 = vand.u32 2147483647, %v333
          %vm351 = vcmp.lt.f32.partialorder %v350, 0.0004427343
          %v352 = vsel %vm351, %v349, %v346
          %v353 = vadd.f32 %v335, 1.0
          %v354 = vlog2.pop %v353
          %v355 = vmul.f32 %v354, 0.6931472
          %v356 = vmul.f32 -0.5, %v335
          %v357 = vadd.f32 %v356, 1.0
          %v358 = vmul.f32 %v357, %v335
          %v359 = vand.u32 2147483647, %v335
          %vm360 = vcmp.lt.f32.partialorder %v359, 0.0004427343
          %v361 = vsel %vm360, %v358, %v355
          %v362 = vadd.f32 %v337, 1.0
          %v363 = vlog2.pop %v362
          %v364 = vmul.f32 %v363, 0.6931472
          %v365 = vmul.f32 -0.5, %v337
          %v366 = vadd.f32 %v365, 1.0
          %v367 = vmul.f32 %v366, %v337
          %v368 = vand.u32 2147483647, %v337
          %vm369 = vcmp.lt.f32.partialorder %v368, 0.0004427343
          %v370 = vsel %vm369, %v367, %v364
          %v371 = vadd.f32 %v339, 1.0
          %v372 = vlog2.pop %v371
          %v373 = vmul.f32 %v372, 0.6931472
          %v374 = vmul.f32 -0.5, %v339
          %v375 = vadd.f32 %v374, 1.0
          %v376 = vmul.f32 %v375, %v339
          %v377 = vand.u32 2147483647, %v339
          %vm378 = vcmp.lt.f32.partialorder %v377, 0.0004427343
          %v379 = vsel %vm378, %v376, %v373
          %v380 = vadd.f32 %v340, %v352
          %v381 = vadd.f32 %v341, %v361
          %v382 = vadd.f32 %v342, %v370
          %v383 = vadd.f32 %v343, %v379
          %v384 = vmul.f32 %v320, %v316
          %v385 = vmul.f32 %v321, %v317
          %v386 = vmul.f32 %v322, %v318
          %v387 = vmul.f32 %v323, %v319
          %v388 = vsub.f32 %v380, %v384
          %v389 = vsub.f32 %v381, %v385
          %v390 = vsub.f32 %v382, %v386
          %v391 = vsub.f32 %v383, %v387
          %v392 = vmul.f32 %v316, -0.25
          %v393 = vmul.f32 %v317, -0.25
          %v394 = vmul.f32 %v318, -0.25
          %v395 = vmul.f32 %v319, -0.25
          %v396 = vadd.f32 %v392, 1.0
          %v397 = vadd.f32 %v393, 1.0
          %v398 = vadd.f32 %v394, 1.0
          %v399 = vadd.f32 %v395, 1.0
          %vm400 = vcmp.ge.f32.partialorder %v320, 0.0
          %vm401 = vcmp.ge.f32.partialorder %v321, 0.0
          %vm402 = vcmp.ge.f32.partialorder %v322, 0.0
          %vm403 = vcmp.ge.f32.partialorder %v323, 0.0
          %v404 = vsel %vm400, 1.0, %v333
          %v405 = vsel %vm401, 1.0, %v335
          %v406 = vsel %vm402, 1.0, %v337
          %v407 = vsel %vm403, 1.0, %v339
          %v408 = vadd.f32 %v333, 1.0
          %v409 = vadd.f32 %v335, 1.0
          %v410 = vadd.f32 %v337, 1.0
          %v411 = vadd.f32 %v339, 1.0
          %v412 = vrcp.pop %v408
          %v413 = vmul.f32 %v404, %v412
          %v414 = vrcp.pop %v409
          %v415 = vmul.f32 %v405, %v414
          %v416 = vrcp.pop %v410
          %v417 = vmul.f32 %v406, %v416
          %v418 = vrcp.pop %v411
          %v419 = vmul.f32 %v407, %v418
          %v420 = vsub.f32 1.0, %v413
          %v421 = vsub.f32 1.0, %v415
          %v422 = vsub.f32 1.0, %v417
          %v423 = vsub.f32 1.0, %v419
          %v424 = vmul.f32 %v420, %v420
          %v425 = vmul.f32 %v421, %v421
          %v426 = vmul.f32 %v422, %v422
          %v427 = vmul.f32 %v423, %v423
          %v428 = vmul.f32 %v413, %v413
          %v429 = vmul.f32 %v415, %v415
          %v430 = vmul.f32 %v417, %v417
          %v431 = vmul.f32 %v419, %v419
          %v432 = vadd.f32 %v424, %v428
          %v433 = vadd.f32 %v425, %v429
          %v434 = vadd.f32 %v426, %v430
          %v435 = vadd.f32 %v427, %v431
          %v436 = vmul.f32 %v396, %v388
          %v437 = vmul.f32 %v397, %v389
          %v438 = vmul.f32 %v398, %v390
          %v439 = vmul.f32 %v399, %v391
          %v440 = vld [vmem:[%s283] sm:$0xff]
          %v441 = vadd.f32 %v436, %v437
          %v442 = vadd.f32 %v441, %v438
          %v443 = vadd.f32 %v442, %v439
          %v444 = vadd.f32 %v440, %v443
          %445 = vst [vmem:[%s283] sm:$0xff] %v444
          %s446 = scalar_lea.vmem %s283, 8 [#allocation8]
          %v447 = vld [vmem:[%s446] sm:$0xff]
          %v448 = vadd.f32 %v396, %v397
          %v449 = vadd.f32 %v448, %v398
          %v450 = vadd.f32 %v449, %v399
          %v451 = vadd.f32 %v447, %v450
          %452 = vst [vmem:[%s446] sm:$0xff] %v451
          %s453 = scalar_lea.vmem %s283, 16 [#allocation8]
          %v454 = vld [vmem:[%s453] sm:$0xff]
          %v455 = vadd.f32 %v432, %v433
          %v456 = vadd.f32 %v455, %v434
          %v457 = vadd.f32 %v456, %v435
          %v458 = vadd.f32 %v454, %v457
          %459 = vst [vmem:[%s453] sm:$0xff] %v458
        $region52: #{tpu_custom_call.1} parent=31 // pred_fallthru
          _
        %p460 = scmp.lt.s32.totalorder %s298, 4096
        // Predicated region
        $region53: #{tpu_custom_call.1} parent=31 // pred_check
          %p461 = pneg %p460
        $region54: #{tpu_custom_call.1} parent=31 // pred_check_branch
          %463 = sbr.rel (%p461) target = $region56
        $region55: #{tpu_custom_call.1} parent=31 // pred_region
          %v464 = vld [vmem:[%s233] sm:$0xff]
          %v465 = vld [vmem:[%s233 + $0x8] sm:$0xff]
          %v466 = vld [vmem:[%s233 + $0x10] sm:$0xff]
          %v467 = vld [vmem:[%s233 + $0x18] sm:$0xff]
          %v468 = vld [vmem:[%s242] sm:$0xff]
          %v469 = vld [vmem:[%s242 + $0x8] sm:$0xff]
          %v470 = vld [vmem:[%s242 + $0x10] sm:$0xff]
          %v471 = vld [vmem:[%s242 + $0x18] sm:$0xff]
          %v472 = vld [vmem:[%s251] sm:$0xff]
          %v473 = vunpack.c.0.s8 %v472
          %v474 = vunpack.c.1.s8 %v472
          %v475 = vunpack.c.2.s8 %v472
          %v476 = vunpack.c.3.s8 %v472
          %v477 = vcvt.s32.f32 %v473
          %v478 = vcvt.s32.f32 %v474
          %v479 = vcvt.s32.f32 %v475
          %v480 = vcvt.s32.f32 %v476
          %v481 = vsub.f32 %v468, %v464
          %v482 = vsub.f32 %v469, %v465
          %v483 = vsub.f32 %v470, %v466
          %v484 = vsub.f32 %v471, %v467
          %v485 = vlaneseq
          %v486 = vshrl.u32 %v485, 7
          %v487 = vadd.s32 %v486, 8
          %v488 = vadd.s32 %v486, 16
          %v489 = vadd.s32 %v486, 24
          %v490 = vlaneseq
          %v491 = vand.u32 %v490, 127
          %v492 = vmul.u32 %v486, 128
          %v493 = vmul.u32 %v487, 128
          %v494 = vmul.u32 %v488, 128
          %v495 = vmul.u32 %v489, 128
          %v496 = vadd.s32 %v492, %v491
          %v497 = vadd.s32 %v493, %v491
          %v498 = vadd.s32 %v494, %v491
          %v499 = vadd.s32 %v495, %v491
          %v500 = vstv %s298
          %vm501 = vcmp.lt.s32.totalorder %v496, %v500
          %vm502 = vcmp.lt.s32.totalorder %v497, %v500
          %vm503 = vcmp.lt.s32.totalorder %v498, %v500
          %vm504 = vcmp.lt.s32.totalorder %v499, %v500
          %v505 = vsel %vm501, 1, 0
          %v506 = vsel %vm502, 1, 0
          %v507 = vsel %vm503, 1, 0
          %v508 = vsel %vm504, 1, 0
          %v509 = vcvt.s32.f32 %v505
          %v510 = vcvt.s32.f32 %v506
          %v511 = vcvt.s32.f32 %v507
          %v512 = vcvt.s32.f32 %v508
          %v513 = vmul.f32 %v481, %v509
          %v514 = vmul.f32 %v482, %v510
          %v515 = vmul.f32 %v483, %v511
          %v516 = vmul.f32 %v484, %v512
          %v517 = vand.u32 2147483647, %v513
          %v518 = vand.u32 2147483647, %v514
          %v519 = vand.u32 2147483647, %v515
          %v520 = vand.u32 2147483647, %v516
          %v521 = vsub.f32 0.0, %v517
          %v522 = vsub.f32 0.0, %v518
          %v523 = vsub.f32 0.0, %v519
          %v524 = vsub.f32 0.0, %v520
          %v525 = vmul.f32 %v521, 1.442695
          %v526 = vpow.pop %v525
          %v527 = vmul.f32 %v522, 1.442695
          %v528 = vpow.pop %v527
          %v529 = vmul.f32 %v523, 1.442695
          %v530 = vpow.pop %v529
          %v531 = vmul.f32 %v524, 1.442695
          %v532 = vpow.pop %v531
          %v533 = vmax.f32 %v513, 0.0
          %v534 = vmax.f32 %v514, 0.0
          %v535 = vmax.f32 %v515, 0.0
          %v536 = vmax.f32 %v516, 0.0
          %v537 = vadd.f32 %v526, 1.0
          %v538 = vlog2.pop %v537
          %v539 = vmul.f32 %v538, 0.6931472
          %v540 = vmul.f32 -0.5, %v526
          %v541 = vadd.f32 %v540, 1.0
          %v542 = vmul.f32 %v541, %v526
          %v543 = vand.u32 2147483647, %v526
          %vm544 = vcmp.lt.f32.partialorder %v543, 0.0004427343
          %v545 = vsel %vm544, %v542, %v539
          %v546 = vadd.f32 %v528, 1.0
          %v547 = vlog2.pop %v546
          %v548 = vmul.f32 %v547, 0.6931472
          %v549 = vmul.f32 -0.5, %v528
          %v550 = vadd.f32 %v549, 1.0
          %v551 = vmul.f32 %v550, %v528
          %v552 = vand.u32 2147483647, %v528
          %vm553 = vcmp.lt.f32.partialorder %v552, 0.0004427343
          %v554 = vsel %vm553, %v551, %v548
          %v555 = vadd.f32 %v530, 1.0
          %v556 = vlog2.pop %v555
          %v557 = vmul.f32 %v556, 0.6931472
          %v558 = vmul.f32 -0.5, %v530
          %v559 = vadd.f32 %v558, 1.0
          %v560 = vmul.f32 %v559, %v530
          %v561 = vand.u32 2147483647, %v530
          %vm562 = vcmp.lt.f32.partialorder %v561, 0.0004427343
          %v563 = vsel %vm562, %v560, %v557
          %v564 = vadd.f32 %v532, 1.0
          %v565 = vlog2.pop %v564
          %v566 = vmul.f32 %v565, 0.6931472
          %v567 = vmul.f32 -0.5, %v532
          %v568 = vadd.f32 %v567, 1.0
          %v569 = vmul.f32 %v568, %v532
          %v570 = vand.u32 2147483647, %v532
          %vm571 = vcmp.lt.f32.partialorder %v570, 0.0004427343
          %v572 = vsel %vm571, %v569, %v566
          %v573 = vadd.f32 %v533, %v545
          %v574 = vadd.f32 %v534, %v554
          %v575 = vadd.f32 %v535, %v563
          %v576 = vadd.f32 %v536, %v572
          %v577 = vmul.f32 %v513, %v477
          %v578 = vmul.f32 %v514, %v478
          %v579 = vmul.f32 %v515, %v479
          %v580 = vmul.f32 %v516, %v480
          %v581 = vsub.f32 %v573, %v577
          %v582 = vsub.f32 %v574, %v578
          %v583 = vsub.f32 %v575, %v579
          %v584 = vsub.f32 %v576, %v580
          %v585 = vmul.f32 %v477, -0.25
          %v586 = vmul.f32 %v478, -0.25
          %v587 = vmul.f32 %v479, -0.25
          %v588 = vmul.f32 %v480, -0.25
          %v589 = vadd.f32 %v585, 1.0
          %v590 = vadd.f32 %v586, 1.0
          %v591 = vadd.f32 %v587, 1.0
          %v592 = vadd.f32 %v588, 1.0
          %vm593 = vcmp.ge.f32.partialorder %v513, 0.0
          %vm594 = vcmp.ge.f32.partialorder %v514, 0.0
          %vm595 = vcmp.ge.f32.partialorder %v515, 0.0
          %vm596 = vcmp.ge.f32.partialorder %v516, 0.0
          %v597 = vsel %vm593, 1.0, %v526
          %v598 = vsel %vm594, 1.0, %v528
          %v599 = vsel %vm595, 1.0, %v530
          %v600 = vsel %vm596, 1.0, %v532
          %v601 = vadd.f32 %v526, 1.0
          %v602 = vadd.f32 %v528, 1.0
          %v603 = vadd.f32 %v530, 1.0
          %v604 = vadd.f32 %v532, 1.0
          %v605 = vrcp.pop %v601
          %v606 = vmul.f32 %v597, %v605
          %v607 = vrcp.pop %v602
          %v608 = vmul.f32 %v598, %v607
          %v609 = vrcp.pop %v603
          %v610 = vmul.f32 %v599, %v609
          %v611 = vrcp.pop %v604
          %v612 = vmul.f32 %v600, %v611
          %v613 = vsub.f32 1.0, %v606
          %v614 = vsub.f32 1.0, %v608
          %v615 = vsub.f32 1.0, %v610
          %v616 = vsub.f32 1.0, %v612
          %v617 = vmul.f32 %v613, %v613
          %v618 = vmul.f32 %v614, %v614
          %v619 = vmul.f32 %v615, %v615
          %v620 = vmul.f32 %v616, %v616
          %v621 = vmul.f32 %v606, %v606
          %v622 = vmul.f32 %v608, %v608
          %v623 = vmul.f32 %v610, %v610
          %v624 = vmul.f32 %v612, %v612
          %v625 = vadd.f32 %v617, %v621
          %v626 = vadd.f32 %v618, %v622
          %v627 = vadd.f32 %v619, %v623
          %v628 = vadd.f32 %v620, %v624
          %v629 = vmul.f32 %v589, %v581
          %v630 = vmul.f32 %v590, %v582
          %v631 = vmul.f32 %v591, %v583
          %v632 = vmul.f32 %v592, %v584
          %v633 = vmul.f32 %v629, %v509
          %v634 = vmul.f32 %v630, %v510
          %v635 = vmul.f32 %v631, %v511
          %v636 = vmul.f32 %v632, %v512
          %v637 = vmul.f32 %v589, %v509
          %v638 = vmul.f32 %v590, %v510
          %v639 = vmul.f32 %v591, %v511
          %v640 = vmul.f32 %v592, %v512
          %v641 = vmul.f32 %v625, %v509
          %v642 = vmul.f32 %v626, %v510
          %v643 = vmul.f32 %v627, %v511
          %v644 = vmul.f32 %v628, %v512
          %v645 = vld [vmem:[%s283] sm:$0xff]
          %v646 = vadd.f32 %v633, %v634
          %v647 = vadd.f32 %v646, %v635
          %v648 = vadd.f32 %v647, %v636
          %v649 = vadd.f32 %v645, %v648
          %650 = vst [vmem:[%s283] sm:$0xff] %v649
          %s651 = scalar_lea.vmem %s283, 8 [#allocation8]
          %v652 = vld [vmem:[%s651] sm:$0xff]
          %v653 = vadd.f32 %v637, %v638
          %v654 = vadd.f32 %v653, %v639
          %v655 = vadd.f32 %v654, %v640
          %v656 = vadd.f32 %v652, %v655
          %657 = vst [vmem:[%s651] sm:$0xff] %v656
          %s658 = scalar_lea.vmem %s283, 16 [#allocation8]
          %v659 = vld [vmem:[%s658] sm:$0xff]
          %v660 = vadd.f32 %v641, %v642
          %v661 = vadd.f32 %v660, %v643
          %v662 = vadd.f32 %v661, %v644
          %v663 = vadd.f32 %v659, %v662
          %664 = vst [vmem:[%s658] sm:$0xff] %v663
        $region56: #{tpu_custom_call.1} parent=31 // pred_fallthru
          _
        %s665 = sand.u32 %s127, 1
        %s666 = scalar_lea.sflag [#allocation4], %s665
        %s667 = sand.u32 %s127, 1
        %s668 = smul.addr %s667, 24
        %s669 = scalar_lea.vmem [#allocation8], %s668
        // Predicated region
        $region57: #{tpu_custom_call.1} parent=31 // pred_check
          %p670 = pneg %p137
        $region58: #{tpu_custom_call.1} parent=31 // pred_check_branch
          %672 = sbr.rel (%p670) target = $region60
        $region59: #{tpu_custom_call.1} parent=31 // pred_region
          %s674 = ssub.s32 384, 384
          %675 = vsyncadd %s666, %s674
          %s676 = smul.addr %s27, 3
          %s677 = smul.addr %s676, 128
          %s678 = scalar_lea.hbm %s3, %s677
          %s679 = sshll.u32 %s669, 4
          %s680 = int_to_ptr.vmem [resolvable:$true] %s679
          %685 = dma.vmem_to_hbm [thread:$0]  %s680, 384, %s678, %s666, 128, 128, 8
        $region60: #{tpu_custom_call.1} parent=31 // pred_fallthru
          _
      $region32: #{tpu_custom_call.1} parent=5 // pred_fallthru
        _
      %p686 = scmp.le.s32.totalorder 2, %s18
      // Predicated region
      $region61: #{tpu_custom_call.1} parent=5 // pred_check
        %p687 = pneg %p686
      $region62: #{tpu_custom_call.1} parent=5 // pred_check_branch
        %689 = sbr.rel (%p687) target = $region64
      $region63: #{tpu_custom_call.1} parent=5 // pred_region
        %s690 = ssub.s32 %s18, 2
        // Predicated region
        $region65: #{tpu_custom_call.1} parent=63 // pred_check
          %p691 = pneg %p143
        $region66: #{tpu_custom_call.1} parent=63 // pred_check_branch
          %693 = sbr.rel (%p691) target = $region68
        $region67: #{tpu_custom_call.1} parent=63 // pred_region
          %s694 = sand.u32 %s128, 1
          %s695 = scalar_lea.sflag [#allocation4], %s694
          %s696 = sand.u32 %s128, 1
          %s697 = smul.addr %s696, 24
          %s698 = scalar_lea.vmem [#allocation8], %s697
          %699 = dma.done %s695, 384
        $region68: #{tpu_custom_call.1} parent=63 // pred_fallthru
          _
      $region64: #{tpu_custom_call.1} parent=5 // pred_fallthru
        _
    $region6: #{tpu_custom_call.1} parent=1 // loop_footer
      %s22 = sadd.s32 1, %s18
    $region7: #{tpu_custom_call.1} parent=1 // loop_footer_branch
      %17 = sbr.rel target = $region3
    $region8: #{tpu_custom_call.1} parent=1 // loop_exit
      _
    %700 = vsyncpa [#allocation3], 1
    %s701 = scalar_lea.sflag [#allocation3], 1
    %702 = vsyncpa %s701, 1
    %703 = vsyncpa [#allocation6], 1
    %s704 = scalar_lea.sflag [#allocation6], 1
    %705 = vsyncpa %s704, 1
    %706 = vsyncpa [#allocation4], 1
    %s707 = scalar_lea.sflag [#allocation4], 1
    %708 = vsyncpa %s707, 1

</llo_original>
